<compile_context>
chip_gen: v7x
topology: tpu7x:2x2x1
jax: 0.10.0
libtpu: 0.0.40
codegen_flags: <defaults>
</compile_context>

<pallas_src>
import functools

import jax
import jax.numpy as jnp
from jax.experimental import pallas as pl
from jax.experimental.pallas import tpu as pltpu

NUM_WEIGHTS = 100
LANES = 128


def _wbce_kernel(x_ref, t_ref, w_ref, psum_ref, *, valid_elems):
    """One batch tile: stable BCE-with-logits * per-row weight, masked to the
    true element count, partially reduced to a lane-dense (8, 128) tile."""
    tile_rows = x_ref.shape[0]
    x = x_ref[...]          # (tile_rows, 128) logits, f32
    t = t_ref[...]          # (tile_rows, 128) targets, f32
    w = w_ref[...]          # (tile_rows, 128) per-sample weights, f32

    # Numerically stable BCE-with-logits, reduction='none':
    #   max(x, 0) - x * t + log(1 + exp(-|x|))
    bce = jnp.maximum(x, 0.0) - x * t + jnp.log1p(jnp.exp(-jnp.abs(x)))

    # Element-level validity mask: global flat index < true element count.
    # Covers both the (<1024-element) alignment tail and any garbage rows read
    # for a partial last grid block.  The select zeroes the *product*, not just
    # the weight, so NaN/Inf garbage cannot propagate into the sum.
    row0 = pl.program_id(0) * tile_rows
    rid = jax.lax.broadcasted_iota(jnp.int32, (tile_rows, LANES), 0)
    lid = jax.lax.broadcasted_iota(jnp.int32, (tile_rows, LANES), 1)
    gidx = (row0 + rid) * LANES + lid
    wl = jnp.where(gidx < valid_elems, bce * w, 0.0)

    # Sublane-group partial reduction -> one aligned (8, 128) vreg per tile
    # (keeps the store full-width / unmasked); final reduce happens outside.
    psum_ref[...] = wl.reshape(tile_rows // 8, 8, LANES).sum(axis=0)[None]


def _pick_tile_rows(rows, requested=None):
    """Tile-row heuristic: multiple of 8, never exceeding the array's rows,
    big enough to hit the streaming roofline, >= 2 tiles for v7x megacore."""
    max_tile = max(8, (rows // 8) * 8)          # block must not exceed the array
    if requested is not None:
        return max(8, min((int(requested) // 8) * 8, max_tile))
    # 1024 rows == 512 KiB/input block; 3 inputs x 2 pipeline buffers ~= 3 MiB
    # VMEM -- fits the default scoped limit on v5e / v6e / v7x.
    tr = min(1024, max_tile)
    # Keep at least 2 grid tiles so the ("parallel",) axis can shard across
    # both v7x TensorCores (callers wanting >= 8 tiles can pass tile_rows).
    while tr > 8 and -(-rows // tr) < 2:
        tr = max(8, ((tr // 2) // 8) * 8)
    return tr


def _wbce_pallas(output, target, weight_table, *, tile_rows=None):
    """output, target: (B, 1) f32; weight_table: (W, 1) f32 -> scalar loss."""
    B = output.shape[0]
    W = weight_table.shape[0]

    x = output.reshape(-1).astype(jnp.float32)            # (B,)
    t = target.reshape(-1).astype(jnp.float32)            # (B,)
    w_tbl = weight_table.reshape(-1).astype(jnp.float32)  # (W,)

    # Per-sample weight lookup hoisted out of the kernel (tiny XLA gather).
    # Do NOT move this in-kernel: no cheap per-lane gather on TPU, and a
    # one-hot/MXU gather costs ~100 VPU compares per element.
    idx = jnp.clip(jnp.round(t * 100.0).astype(jnp.int32) - 1, 0, W - 1)
    w = w_tbl[idx]                                         # (B,)

    # Lane-dense (rows, 128) view.  For B % 128 == 0 and B >= 1024 this is a
    # free row-major bitcast (no padded HBM copies of x/t/w).  Otherwise pad by
    # fewer than 1024 elements; the in-kernel mask makes pad values irrelevant.
    rows = max(-(-B // LANES), 8)            # cdiv, floored at 8 sublanes
    n_elems = rows * LANES
    pad = n_elems - B
    if pad:
        x = jnp.pad(x, (0, pad))
        t = jnp.pad(t, (0, pad))
        w = jnp.pad(w, (0, pad))
    x = x.reshape(rows, LANES)
    t = t.reshape(rows, LANES)
    w = w.reshape(rows, LANES)

    tr = _pick_tile_rows(rows, tile_rows)
    num_tiles = -(-rows // tr)               # partial last block is masked

    kernel = functools.partial(_wbce_kernel, valid_elems=B)
    partials = pl.pallas_call(
        kernel,
        out_shape=jax.ShapeDtypeStruct((num_tiles, 8, LANES), jnp.float32),
        grid=(num_tiles,),
        in_specs=[
            pl.BlockSpec((tr, LANES), lambda i: (i, 0)),
            pl.BlockSpec((tr, LANES), lambda i: (i, 0)),
            pl.BlockSpec((tr, LANES), lambda i: (i, 0)),
        ],
        out_specs=pl.BlockSpec((1, 8, LANES), lambda i: (i, 0, 0)),
        compiler_params=pltpu.CompilerParams(
            dimension_semantics=("parallel",),   # shards tiles across v7x TCs
        ),
        # Advisory: short, memory-bound custom call -> lets XLA overlap the
        # weight gather / index math around it.
        cost_estimate=pl.CostEstimate(
            flops=10 * n_elems,
            transcendentals=2 * n_elems,
            bytes_accessed=3 * n_elems * 4 + num_tiles * 8 * LANES * 4,
        ),
    )(x, t, w)

    # Finish the reduction on the tiny (num_tiles, 8, 128) partials; divide by
    # the true batch size (masked / padded elements contributed exactly zero).
    return jnp.sum(partials) / jnp.float32(B)


def _reference(output, target, weight_table):
    """Pure-JAX reference mirroring the module's forward (vectorized)."""
    output = output.astype(jnp.float32)
    target = target.astype(jnp.float32)
    bce = (jnp.maximum(output, 0.0) - output * target
           + jnp.log1p(jnp.exp(-jnp.abs(output))))
    W = weight_table.shape[0]
    idx = jnp.clip(jnp.round(target[:, 0] * 100.0).astype(jnp.int32) - 1, 0, W - 1)
    w = weight_table.astype(jnp.float32)[idx]        # (B, 1)
    return jnp.mean(bce * w)


def weighted_bce_with_logits_loss(output, target, weight_table, *,
                                  tile_rows=None,
                                  min_batch_for_kernel=4096,
                                  force_pallas=False):
    """Dispatch: Pallas kernel for large batches, pure-JAX path for tiny ones
    (pallas_call launch overhead dominates sub-microsecond work)."""
    B = output.shape[0]
    if force_pallas or B >= min_batch_for_kernel:
        return _wbce_pallas(output, target, weight_table, tile_rows=tile_rows)
    return _reference(output, target, weight_table)


if __name__ == "__main__":
    key = jax.random.PRNGKey(0)
    k1, k2, k3, k4 = jax.random.split(key, 4)

    # Deterministic weight table (module.__init__ takes an arbitrary weight vector).
    weight = jnp.linspace(0.5, 1.5, NUM_WEIGHTS, dtype=jnp.float32)
    weight_table = weight.reshape(NUM_WEIGHTS, 1)    # np.expand_dims(weight, 1)

    # Case 1: ragged batch (B not a multiple of 128) with a small forced tile
    # -> exercises the alignment pad, the in-kernel tail mask and a multi-tile
    # grid at demo size.
    B = 2000
    output = jax.random.normal(k1, (B, 1), dtype=jnp.float32)
    paw = jax.random.randint(k2, (B, 1), 1, NUM_WEIGHTS + 1)
    target = paw.astype(jnp.float32) / 100.0
    loss = weighted_bce_with_logits_loss(
        output, target, weight_table, tile_rows=8, force_pallas=True)
    loss = jax.block_until_ready(loss)
    ref = _reference(output, target, weight_table)
    assert jnp.allclose(loss, ref, rtol=1e-5, atol=1e-6), (loss, ref)

    # Case 2: aligned batch with automatic tile selection -> copy-free reshape
    # path (no jnp.pad), default tiling, >= 2 grid tiles.
    B2 = 2048
    out2 = jax.random.normal(k3, (B2, 1), dtype=jnp.float32)
    paw2 = jax.random.randint(k4, (B2, 1), 1, NUM_WEIGHTS + 1)
    tgt2 = paw2.astype(jnp.float32) / 100.0
    loss2 = weighted_bce_with_logits_loss(out2, tgt2, weight_table,
                                          force_pallas=True)
    loss2 = jax.block_until_ready(loss2)
    ref2 = _reference(out2, tgt2, weight_table)
    assert jnp.allclose(loss2, ref2, rtol=1e-5, atol=1e-6), (loss2, ref2)

    # TODO(synk): optional bf16 packing of (t, w) (12 -> 8 B/elem) left out to
    # preserve f32-exact parity with the reference.
    print("KERNEL_OK")
</pallas_src>

<mosaic_0001>
module attributes {stable_mosaic.version = 11 : i64} {
  func.func @_wbce_kernel(%arg0: i32, %arg1: memref<8x128xf32, #tpu.memory_space<vmem>>, %arg2: memref<8x128xf32, #tpu.memory_space<vmem>>, %arg3: memref<8x128xf32, #tpu.memory_space<vmem>>, %arg4: memref<1x8x128xf32, #tpu.memory_space<vmem>>) attributes {dimension_semantics = [#tpu.dimension_semantics<parallel>], iteration_bounds = array<i64: 2>, scalar_prefetch = 0 : i64, scratch_operands = 0 : i64, tpu.core_type = #tpu.core_type<tc>, window_params = [{transform_indices = @transform_0, window_bounds = array<i64: 8, 128>}, {transform_indices = @transform_1, window_bounds = array<i64: 8, 128>}, {transform_indices = @transform_2, window_bounds = array<i64: 8, 128>}, {transform_indices = @transform_3, window_bounds = array<i64: 1, 8, 128>}]} {
    %c0 = arith.constant 0 : index
    %c0_0 = arith.constant 0 : index
    %0 = vector.load %arg1[%c0, %c0_0] : memref<8x128xf32, #tpu.memory_space<vmem>>, vector<8x128xf32>
    %c0_1 = arith.constant 0 : index
    %c0_2 = arith.constant 0 : index
    %1 = vector.load %arg2[%c0_1, %c0_2] : memref<8x128xf32, #tpu.memory_space<vmem>>, vector<8x128xf32>
    %c0_3 = arith.constant 0 : index
    %c0_4 = arith.constant 0 : index
    %2 = vector.load %arg3[%c0_3, %c0_4] : memref<8x128xf32, #tpu.memory_space<vmem>>, vector<8x128xf32>
    %cst = arith.constant 0.000000e+00 : f32
    %3 = vector.broadcast %cst : f32 to vector<8x128xf32>
    %4 = arith.maximumf %0, %3 : vector<8x128xf32>
    %5 = arith.mulf %0, %1 : vector<8x128xf32>
    %6 = arith.subf %4, %5 : vector<8x128xf32>
    %7 = math.absf %0 : vector<8x128xf32>
    %cst_5 = arith.constant 0.000000e+00 : f32
    %8 = vector.broadcast %cst_5 : f32 to vector<8x128xf32>
    %9 = arith.subf %8, %7 : vector<8x128xf32>
    %10 = math.exp %9 : vector<8x128xf32>
    %11 = math.log1p %10 : vector<8x128xf32>
    %12 = arith.addf %6, %11 : vector<8x128xf32>
    %c8_i32 = arith.constant 8 : i32
    %13 = arith.muli %arg0, %c8_i32 : i32
    %14 = tpu.iota {dimensions = array<i32: 0>} : vector<8x128xi32>
    %15 = tpu.iota {dimensions = array<i32: 1>} : vector<8x128xi32>
    %16 = vector.broadcast %13 : i32 to vector<8x128xi32>
    %17 = arith.addi %16, %14 : vector<8x128xi32>
    %c128_i32 = arith.constant 128 : i32
    %18 = vector.broadcast %c128_i32 : i32 to vector<8x128xi32>
    %19 = arith.muli %17, %18 : vector<8x128xi32>
    %20 = arith.addi %19, %15 : vector<8x128xi32>
    %c2000_i32 = arith.constant 2000 : i32
    %21 = vector.broadcast %c2000_i32 : i32 to vector<8x128xi32>
    %22 = arith.cmpi slt, %20, %21 : vector<8x128xi32>
    %23 = arith.mulf %12, %2 : vector<8x128xf32>
    %cst_6 = arith.constant 0.000000e+00 : f32
    %24 = vector.broadcast %cst_6 : f32 to vector<8x128xf32>
    %25 = arith.select %22, %23, %24 : vector<8x128xi1>, vector<8x128xf32>
    %26 = vector.shape_cast %25 : vector<8x128xf32> to vector<1x8x128xf32>
    %cst_7 = arith.constant dense<0.000000e+00> : vector<8x128xf32>
    %27 = vector.multi_reduction <add>, %26, %cst_7 [0] : vector<1x8x128xf32> to vector<8x128xf32>
    %28 = vector.shape_cast %27 : vector<8x128xf32> to vector<1x8x128xf32>
    %c0_8 = arith.constant 0 : index
    %c0_9 = arith.constant 0 : index
    %c0_10 = arith.constant 0 : index
    %29 = vector.load %arg4[%c0_8, %c0_9, %c0_10] : memref<1x8x128xf32, #tpu.memory_space<vmem>>, vector<1x8x128xf32>
    tpu.vector_store %arg4[%c0_8, %c0_9, %c0_10], %28 {strides = array<i32>} : memref<1x8x128xf32, #tpu.memory_space<vmem>>, vector<1x8x128xf32>,
    return
  }
  func.func @transform_0(%arg0: i32) -> (i32, i32) {
    %c0_i32 = arith.constant 0 : i32
    %c0_i32_0 = arith.constant 0 : i32
    return %arg0, %c0_i32 : i32, i32
  }
  func.func @transform_1(%arg0: i32) -> (i32, i32) {
    %c0_i32 = arith.constant 0 : i32
    %c0_i32_0 = arith.constant 0 : i32
    return %arg0, %c0_i32 : i32, i32
  }
  func.func @transform_2(%arg0: i32) -> (i32, i32) {
    %c0_i32 = arith.constant 0 : i32
    %c0_i32_0 = arith.constant 0 : i32
    return %arg0, %c0_i32 : i32, i32
  }
  func.func @transform_3(%arg0: i32) -> (i32, i32, i32) {
    %c0_i32 = arith.constant 0 : i32
    %c0_i32_0 = arith.constant 0 : i32
    %c0_i32_1 = arith.constant 0 : i32
    return %arg0, %c0_i32, %c0_i32_0 : i32, i32, i32
  }
}

</mosaic_0001>

<llo_original>
// kernel: tpu_custom_call.1
$region0: #{tpu_custom_call.1}
  #allocation0 [shape = 'u32[]', space=smem, size = 0x4, offset = 0x4, fixed_abs, tag = 'smem constant byte address 0x4 - core index']
  #allocation1 [shape = 'u32[144,128]{1,0:T(1,128)}', space=vmem, size = 0x12000, scoped, tag = 'internal scratch']
  %s0 = inlined_call_operand.hbm [shape: f32[16,128], index: 0, kind: input, shape index: {}]
  %s1 = inlined_call_operand.hbm [shape: f32[16,128], index: 1, kind: input, shape index: {}]
  %s2 = inlined_call_operand.hbm [shape: f32[16,128], index: 2, kind: input, shape index: {}]
  %s3 = inlined_call_operand.hbm [shape: f32[2,8,128], index: 3, kind: output, shape index: {}]
  %s4 = sld [smem:[#allocation0]]
  $region57: #{tpu_custom_call.1} parent=0
    _
  %s6 = ssub.s32 1, %s4
  %s7 = scalar_select 0, %s6, %s4
  $region1: #{tpu_custom_call.1} parent=0
    #allocation2 [shape = 'u8[8192]{0}', space=vmem, size = 0x2000, scoped, tag = 'input window, operand 0']
    #allocation3 [shape = 's32[2]{0}', space=sflag, size = 0x8, scoped, tag = 'scoped memory for tpu_custom_call.1']
    #allocation4 [shape = 's32[2]{0}', space=sflag, size = 0x8, scoped, tag = 'scoped memory for tpu_custom_call.1']
    #allocation5 [shape = 'u8[8192]{0}', space=vmem, size = 0x2000, scoped, tag = 'input window, operand 1']
    #allocation6 [shape = 's32[2]{0}', space=sflag, size = 0x8, scoped, tag = 'scoped memory for tpu_custom_call.1']
    #allocation7 [shape = 'u8[8192]{0}', space=vmem, size = 0x2000, scoped, tag = 'input window, operand 2']
    #allocation8 [shape = 'u8[8192]{0}', space=vmem, size = 0x2000, scoped, tag = 'output window, operand 0']
    %8 = vsyncpa [#allocation3], 0
    %s9 = scalar_lea.sflag [#allocation3], 1
    %10 = vsyncpa %s9, 0
    %11 = vsyncpa [#allocation6], 0
    %s12 = scalar_lea.sflag [#allocation6], 1
    %13 = vsyncpa %s12, 0
    %14 = vsyncpa [#allocation4], 0
    %s15 = scalar_lea.sflag [#allocation4], 1
    %16 = vsyncpa %s15, 0
    loop: start=0, step=1, limit=4
    $region2: #{tpu_custom_call.1} parent=1 // loop_pre_header
      _
    $region3: #{tpu_custom_call.1} parent=1 // loop_header
      %s18 = sphi 0, %s22
      %p19 = scmp.ge.s32.totalorder %s18, 4
      %s28 = sphi 0, %s30
      %s31 = sphi 0, %s28
      %s32 = sphi 0, %s31
      %s48 = sphi 0, %s32
      %s54 = sphi 0, %s56
      %s57 = sphi 0, %s54
      %s58 = sphi 0, %s57
      %s74 = sphi 0, %s58
      %s80 = sphi 0, %s82
      %s83 = sphi 0, %s80
      %s84 = sphi 0, %s83
      %s100 = sphi 0, %s84
      %s106 = sphi 0, %s108
      %s109 = sphi 0, %s106
      %s110 = sphi 0, %s109
      %s126 = sphi 0, %s110
    $region4: #{tpu_custom_call.1} parent=1 // loop_header_branch
      %21 = sbr.rel (%p19) target = $region8
    $region5: #{tpu_custom_call.1} parent=1 // loop_body
      %s23 = ssub.s32 %s18, 1
      %s24 = ssub.s32 %s18, 2
      %s25 = sadd.s32 %s18, 1
      %s26 = ssub.s32 %s18, %s25
      %p27 = scmp.eq.s32.totalorder %s26, 0
      %s29 = sadd.s32 %s28, 1
      %s30 = scalar_select %p27, %s28, %s29
      %p33 = pneg %p27
      %p34 = scmp.eq.s32.totalorder %s18, 1
      %p35 = por %p33, %p34
      %p36 = scmp.ne.s32.totalorder %s28, %s31
      %p37 = scmp.eq.s32.totalorder %s18, 0
      %p38 = por %p36, %p37
      %p39 = scmp.ne.s32.totalorder %s28, %s31
      %p40 = scmp.eq.s32.totalorder %s23, 1
      %p41 = por %p39, %p40
      %p42 = scmp.ne.s32.totalorder %s31, %s32
      %p43 = scmp.eq.s32.totalorder %s23, 0
      %p44 = por %p42, %p43
      %p45 = scmp.ne.s32.totalorder %s31, %s32
      %p46 = scmp.eq.s32.totalorder %s24, 1
      %p47 = por %p45, %p46
      %p49 = scmp.ne.s32.totalorder %s32, %s48
      %p50 = scmp.eq.s32.totalorder %s24, 0
      %p51 = por %p49, %p50
      %s52 = ssub.s32 %s18, %s25
      %p53 = scmp.eq.s32.totalorder %s52, 0
      %s55 = sadd.s32 %s54, 1
      %s56 = scalar_select %p53, %s54, %s55
      %p59 = pneg %p53
      %p60 = scmp.eq.s32.totalorder %s18, 1
      %p61 = por %p59, %p60
      %p62 = scmp.ne.s32.totalorder %s54, %s57
      %p63 = scmp.eq.s32.totalorder %s18, 0
      %p64 = por %p62, %p63
      %p65 = scmp.ne.s32.totalorder %s54, %s57
      %p66 = scmp.eq.s32.totalorder %s23, 1
      %p67 = por %p65, %p66
      %p68 = scmp.ne.s32.totalorder %s57, %s58
      %p69 = scmp.eq.s32.totalorder %s23, 0
      %p70 = por %p68, %p69
      %p71 = scmp.ne.s32.totalorder %s57, %s58
      %p72 = scmp.eq.s32.totalorder %s24, 1
      %p73 = por %p71, %p72
      %p75 = scmp.ne.s32.totalorder %s58, %s74
      %p76 = scmp.eq.s32.totalorder %s24, 0
      %p77 = por %p75, %p76
      %s78 = ssub.s32 %s18, %s25
      %p79 = scmp.eq.s32.totalorder %s78, 0
      %s81 = sadd.s32 %s80, 1
      %s82 = scalar_select %p79, %s80, %s81
      %p85 = pneg %p79
      %p86 = scmp.eq.s32.totalorder %s18, 1
      %p87 = por %p85, %p86
      %p88 = scmp.ne.s32.totalorder %s80, %s83
      %p89 = scmp.eq.s32.totalorder %s18, 0
      %p90 = por %p88, %p89
      %p91 = scmp.ne.s32.totalorder %s80, %s83
      %p92 = scmp.eq.s32.totalorder %s23, 1
      %p93 = por %p91, %p92
      %p94 = scmp.ne.s32.totalorder %s83, %s84
      %p95 = scmp.eq.s32.totalorder %s23, 0
      %p96 = por %p94, %p95
      %p97 = scmp.ne.s32.totalorder %s83, %s84
      %p98 = scmp.eq.s32.totalorder %s24, 1
      %p99 = por %p97, %p98
      %p101 = scmp.ne.s32.totalorder %s84, %s100
      %p102 = scmp.eq.s32.totalorder %s24, 0
      %p103 = por %p101, %p102
      %s104 = ssub.s32 %s18, %s25
      %p105 = scmp.eq.s32.totalorder %s104, 0
      %s107 = sadd.s32 %s106, 1
      %s108 = scalar_select %p105, %s106, %s107
      %p111 = pneg %p105
      %p112 = scmp.eq.s32.totalorder %s18, 1
      %p113 = por %p111, %p112
      %p114 = scmp.ne.s32.totalorder %s106, %s109
      %p115 = scmp.eq.s32.totalorder %s18, 0
      %p116 = por %p114, %p115
      %p117 = scmp.ne.s32.totalorder %s106, %s109
      %p118 = scmp.eq.s32.totalorder %s23, 1
      %p119 = por %p117, %p118
      %p120 = scmp.ne.s32.totalorder %s109, %s110
      %p121 = scmp.eq.s32.totalorder %s23, 0
      %p122 = por %p120, %p121
      %p123 = scmp.ne.s32.totalorder %s109, %s110
      %p124 = scmp.eq.s32.totalorder %s24, 1
      %p125 = por %p123, %p124
      %p127 = scmp.ne.s32.totalorder %s110, %s126
      %p128 = scmp.eq.s32.totalorder %s24, 0
      %p129 = por %p127, %p128
      %p130 = scmp.le.s32.totalorder 1, %s18
      %p131 = scmp.lt.s32.totalorder %s18, 3
      %p132 = pnand %p130, %p131
      %p133 = pneg %p132
      // Predicated region
      $region9: #{tpu_custom_call.1} parent=5 // pred_check
        _
      $region10: #{tpu_custom_call.1} parent=5 // pred_check_branch
        %135 = sbr.rel (%p132) target = $region12
      $region11: #{tpu_custom_call.1} parent=5 // pred_region
        %s136 = ssub.s32 %s18, 1
      $region12: #{tpu_custom_call.1} parent=5 // pred_fallthru
        _
      %p137 = scmp.lt.s32.totalorder %s18, 2
      // Predicated region
      $region13: #{tpu_custom_call.1} parent=5 // pred_check
        %p138 = pneg %p137
      $region14: #{tpu_custom_call.1} parent=5 // pred_check_branch
        %140 = sbr.rel (%p138) target = $region16
      $region15: #{tpu_custom_call.1} parent=5 // pred_region
        // Predicated region
        $region17: #{tpu_custom_call.1} parent=15 // pred_check
          %p141 = pneg %p38
        $region18: #{tpu_custom_call.1} parent=15 // pred_check_branch
          %143 = sbr.rel (%p141) target = $region20
        $region19: #{tpu_custom_call.1} parent=15 // pred_region
          %s144 = sand.u32 %s28, 1
          %s145 = scalar_lea.sflag [#allocation3], %s144
          %s146 = sand.u32 %s28, 1
          %s147 = smul.addr %s146, 8
          %s148 = scalar_lea.vmem [#allocation2], %s147
          %s150 = ssub.s32 128, 128
          %151 = vsyncadd %s145, %s150
          %s152 = smul.addr %s18, 128
          %s153 = scalar_lea.hbm %s0, %s152
          %s155 = sshll.u32 %s148, 4
          %s156 = int_to_ptr.vmem [resolvable:$true] %s155
          %158 = dma.hbm_to_vmem [thread:$0]  %s153, 128, %s156, %s145
        $region20: #{tpu_custom_call.1} parent=15 // pred_fallthru
          _
        // Predicated region
        $region21: #{tpu_custom_call.1} parent=15 // pred_check
          %p159 = pneg %p64
        $region22: #{tpu_custom_call.1} parent=15 // pred_check_branch
          %161 = sbr.rel (%p159) target = $region24
        $region23: #{tpu_custom_call.1} parent=15 // pred_region
          %s162 = sand.u32 %s18, 1
          %s163 = scalar_lea.sflag [#allocation6], %s162
          %s164 = sand.u32 %s54, 1
          %s165 = smul.addr %s164, 8
          %s166 = scalar_lea.vmem [#allocation5], %s165
          %s168 = ssub.s32 128, 128
          %169 = vsyncadd %s163, %s168
          %s170 = smul.addr %s18, 128
          %s171 = scalar_lea.hbm %s1, %s170
          %s173 = sshll.u32 %s166, 4
          %s174 = int_to_ptr.vmem [resolvable:$true] %s173
          %176 = dma.hbm_to_vmem [thread:$0]  %s171, 128, %s174, %s163
        $region24: #{tpu_custom_call.1} parent=15 // pred_fallthru
          _
        // Predicated region
        $region25: #{tpu_custom_call.1} parent=15 // pred_check
          %p177 = pneg %p90
        $region26: #{tpu_custom_call.1} parent=15 // pred_check_branch
          %179 = sbr.rel (%p177) target = $region28
        $region27: #{tpu_custom_call.1} parent=15 // pred_region
          %s180 = sand.u32 %s18, 1
          %s181 = scalar_lea.sflag [#allocation6], %s180
          %s182 = sand.u32 %s80, 1
          %s183 = smul.addr %s182, 8
          %s184 = scalar_lea.vmem [#allocation7], %s183
          %s186 = ssub.s32 128, 128
          %187 = vsyncadd %s181, %s186
          %s188 = smul.addr %s18, 128
          %s189 = scalar_lea.hbm %s2, %s188
          %s191 = sshll.u32 %s184, 4
          %s192 = int_to_ptr.vmem [resolvable:$true] %s191
          %194 = dma.hbm_to_vmem [thread:$0]  %s189, 128, %s192, %s181
        $region28: #{tpu_custom_call.1} parent=15 // pred_fallthru
          _
      $region16: #{tpu_custom_call.1} parent=5 // pred_fallthru
        _
      %p195 = scmp.le.s32.totalorder 1, %s18
      %p196 = scmp.lt.s32.totalorder %s18, 3
      %p197 = pnand %p195, %p196
      %p198 = pneg %p197
      // Predicated region
      $region29: #{tpu_custom_call.1} parent=5 // pred_check
        _
      $region30: #{tpu_custom_call.1} parent=5 // pred_check_branch
        %200 = sbr.rel (%p197) target = $region32
      $region31: #{tpu_custom_call.1} parent=5 // pred_region
        %s201 = ssub.s32 %s18, 1
        %s202 = sand.u32 %s31, 1
        %s203 = scalar_lea.sflag [#allocation3], %s202
        %s204 = sand.u32 %s31, 1
        %s205 = smul.addr %s204, 8
        %s206 = scalar_lea.vmem [#allocation2], %s205
        // Predicated region
        $region33: #{tpu_custom_call.1} parent=31 // pred_check
          %p207 = pneg %p44
        $region34: #{tpu_custom_call.1} parent=31 // pred_check_branch
          %209 = sbr.rel (%p207) target = $region36
        $region35: #{tpu_custom_call.1} parent=31 // pred_region
          %210 = dma.done %s203, 128
        $region36: #{tpu_custom_call.1} parent=31 // pred_fallthru
          _
        %s211 = sand.u32 %s23, 1
        %s212 = scalar_lea.sflag [#allocation6], %s211
        %s213 = sand.u32 %s57, 1
        %s214 = smul.addr %s213, 8
        %s215 = scalar_lea.vmem [#allocation5], %s214
        // Predicated region
        $region37: #{tpu_custom_call.1} parent=31 // pred_check
          %p216 = pneg %p70
        $region38: #{tpu_custom_call.1} parent=31 // pred_check_branch
          %218 = sbr.rel (%p216) target = $region40
        $region39: #{tpu_custom_call.1} parent=31 // pred_region
          %219 = dma.done %s212, 128
        $region40: #{tpu_custom_call.1} parent=31 // pred_fallthru
          _
        %s220 = sand.u32 %s23, 1
        %s221 = scalar_lea.sflag [#allocation6], %s220
        %s222 = sand.u32 %s83, 1
        %s223 = smul.addr %s222, 8
        %s224 = scalar_lea.vmem [#allocation7], %s223
        // Predicated region
        $region41: #{tpu_custom_call.1} parent=31 // pred_check
          %p225 = pneg %p96
        $region42: #{tpu_custom_call.1} parent=31 // pred_check_branch
          %227 = sbr.rel (%p225) target = $region44
        $region43: #{tpu_custom_call.1} parent=31 // pred_region
          %228 = dma.done %s221, 128
        $region44: #{tpu_custom_call.1} parent=31 // pred_fallthru
          _
        %s229 = sand.u32 %s31, 1
        %s230 = scalar_lea.sflag [#allocation3], %s229
        %s231 = sand.u32 %s31, 1
        %s232 = smul.addr %s231, 8
        %s233 = scalar_lea.vmem [#allocation2], %s232
        %p234 = pneg %p44
        %p235 = pneg %p41
        %s236 = sand.u32 %s23, 1
        %s237 = scalar_lea.sflag [#allocation6], %s236
        %s238 = sand.u32 %s57, 1
        %s239 = smul.addr %s238, 8
        %s240 = scalar_lea.vmem [#allocation5], %s239
        %p241 = pneg %p70
        %p242 = pneg %p67
        %s243 = sand.u32 %s23, 1
        %s244 = scalar_lea.sflag [#allocation6], %s243
        %s245 = sand.u32 %s83, 1
        %s246 = smul.addr %s245, 8
        %s247 = scalar_lea.vmem [#allocation7], %s246
        %p248 = pneg %p96
        %p249 = pneg %p93
        %p250 = pneg %p122
        %p251 = pneg %p119
        %s252 = sand.u32 %s109, 1
        %s253 = scalar_lea.sflag [#allocation4], %s252
        %s254 = sand.u32 %s109, 1
        %s255 = smul.addr %s254, 8
        %s256 = scalar_lea.vmem [#allocation8], %s255
        %v257 = vld [vmem:[%s206] sm:$0xff]
        %v258 = vld [vmem:[%s215] sm:$0xff]
        %v259 = vld [vmem:[%s224] sm:$0xff]
        %v260 = vmax.f32 %v257, 0.0
        %v261 = vmul.f32 %v257, %v258
        %v262 = vsub.f32 %v260, %v261
        %v263 = vand.u32 2147483647, %v257
        %v264 = vsub.f32 0.0, %v263
        %v265 = vmul.f32 %v264, 1.442695
        %v266 = vpow.pop %v265
        %v267 = vadd.f32 %v266, 1.0
        %v268 = vlog2.pop %v267
        %v269 = vmul.f32 %v268, 0.6931472
        %v270 = vmul.f32 -0.5, %v266
        %v271 = vadd.f32 %v270, 1.0
        %v272 = vmul.f32 %v271, %v266
        %v273 = vand.u32 2147483647, %v266
        %vm274 = vcmp.lt.f32.partialorder %v273, 0.0004427343
        %v275 = vsel %vm274, %v272, %v269
        %v276 = vadd.f32 %v262, %v275
        %s277 = smul.u32 %s23, 8
        %v278 = vlaneseq
        %v279 = vshrl.u32 %v278, 7
        %v280 = vlaneseq
        %v281 = vand.u32 %v280, 127
        %v282 = vstv %s277
        %v283 = vadd.s32 %v282, %v279
        %v284 = vmul.u32 %v283, 128
        %v285 = vadd.s32 %v284, %v281
        %vm286 = vcmp.lt.s32.totalorder %v285, 2000
        %v287 = vmul.f32 %v276, %v259
        %v288 = vsel %vm286, %v287, 0.0
        %v289 = vadd.f32 %v288, 0.0
        %290 = vst [vmem:[%s256] sm:$0xff] %v289
        %s291 = sand.u32 %s109, 1
        %s292 = scalar_lea.sflag [#allocation4], %s291
        %s293 = sand.u32 %s109, 1
        %s294 = smul.addr %s293, 8
        %s295 = scalar_lea.vmem [#allocation8], %s294
        // Predicated region
        $region45: #{tpu_custom_call.1} parent=31 // pred_check
          %p296 = pneg %p119
        $region46: #{tpu_custom_call.1} parent=31 // pred_check_branch
          %298 = sbr.rel (%p296) target = $region48
        $region47: #{tpu_custom_call.1} parent=31 // pred_region
          %s300 = ssub.s32 128, 128
          %301 = vsyncadd %s292, %s300
          %s302 = smul.addr %s23, 128
          %s303 = scalar_lea.hbm %s3, %s302
          %s305 = sshll.u32 %s295, 4
          %s306 = int_to_ptr.vmem [resolvable:$true] %s305
          %308 = dma.vmem_to_hbm [thread:$0]  %s306, 128, %s303, %s292
        $region48: #{tpu_custom_call.1} parent=31 // pred_fallthru
          _
      $region32: #{tpu_custom_call.1} parent=5 // pred_fallthru
        _
      %p309 = scmp.le.s32.totalorder 2, %s18
      // Predicated region
      $region49: #{tpu_custom_call.1} parent=5 // pred_check
        %p310 = pneg %p309
      $region50: #{tpu_custom_call.1} parent=5 // pred_check_branch
        %312 = sbr.rel (%p310) target = $region52
      $region51: #{tpu_custom_call.1} parent=5 // pred_region
        %s313 = ssub.s32 %s18, 2
        // Predicated region
        $region53: #{tpu_custom_call.1} parent=51 // pred_check
          %p314 = pneg %p125
        $region54: #{tpu_custom_call.1} parent=51 // pred_check_branch
          %316 = sbr.rel (%p314) target = $region56
        $region55: #{tpu_custom_call.1} parent=51 // pred_region
          %s317 = sand.u32 %s110, 1
          %s318 = scalar_lea.sflag [#allocation4], %s317
          %s319 = sand.u32 %s110, 1
          %s320 = smul.addr %s319, 8
          %s321 = scalar_lea.vmem [#allocation8], %s320
          %322 = dma.done %s318, 128
        $region56: #{tpu_custom_call.1} parent=51 // pred_fallthru
          _
      $region52: #{tpu_custom_call.1} parent=5 // pred_fallthru
        _
    $region6: #{tpu_custom_call.1} parent=1 // loop_footer
      %s22 = sadd.s32 1, %s18
    $region7: #{tpu_custom_call.1} parent=1 // loop_footer_branch
      %17 = sbr.rel target = $region3
    $region8: #{tpu_custom_call.1} parent=1 // loop_exit
      _
    %323 = vsyncpa [#allocation3], 1
    %s324 = scalar_lea.sflag [#allocation3], 1
    %325 = vsyncpa %s324, 1
    %326 = vsyncpa [#allocation6], 1
    %s327 = scalar_lea.sflag [#allocation6], 1
    %328 = vsyncpa %s327, 1
    %329 = vsyncpa [#allocation4], 1
    %s330 = scalar_lea.sflag [#allocation4], 1
    %331 = vsyncpa %s330, 1

</llo_original>
